<compile_context>
chip_gen: v7x
topology: tpu7x:2x2x1
jax: 0.10.0
libtpu: 0.0.40
codegen_flags: <defaults>
</compile_context>

<pallas_src>
import math

import jax
import jax.numpy as jnp
from jax import lax
from jax.experimental import pallas as pl
from jax.experimental.pallas import tpu as pltpu


# -----------------------------------------------------------------------------
# Glue: B-spline / group machinery (plain JAX — builds the sampled conv kernel)
# -----------------------------------------------------------------------------
def cardinal_bspline(x, n):
    """Cardinal B-spline of order n, support [-(n+1)/2, (n+1)/2]."""
    acc = jnp.zeros_like(x)
    for k in range(n + 2):
        coeff = ((-1) ** k) * math.comb(n + 1, k)
        acc = acc + coeff * jnp.maximum(x + (n + 1) / 2.0 - k, 0.0) ** n
    return acc / math.factorial(n)


def x_centers_init(d, size):
    """Dense-grid path of the torch x_centers_init (n_basis=None, b_groups=1)."""
    x_min = size // 2 - size + 1
    x_max = size // 2
    r = jnp.arange(x_min, x_max + 1, dtype=jnp.float32)
    ii, jj = jnp.meshgrid(r, r, indexing="ij")
    centers = jnp.stack([ii, jj], -1).reshape(-1, d)          # [size**d, d]
    return centers, size ** d, x_min, x_max


def build_group_kernel(weights, bias, centers, vsize, thetas, n, s):
    """Sample the B-spline kernel on the h^{-1}-transformed grid for every h.

    Returns:
      w_conv: [vs, vs, Cin, N_h*Cout]  (HWIO, fused channel = h*Cout + cout)
      b_conv: [1, N_h*Cout]
    """
    Cout, Cin, N = weights.shape
    half = vsize // 2
    r = jnp.arange(-half, half + 1, dtype=jnp.float32)
    yy, xx = jnp.meshgrid(r, r, indexing="ij")
    grid = jnp.stack([yy, xx], -1)                            # [vs, vs, 2]
    c, si = jnp.cos(thetas), jnp.sin(thetas)
    # R(-theta): inverse rotation applied to the sampling grid
    rot_inv = jnp.stack([jnp.stack([c, si], -1),
                         jnp.stack([-si, c], -1)], -2)        # [N_h, 2, 2]
    gx = jnp.einsum("hab,ijb->hija", rot_inv, grid)           # [N_h, vs, vs, 2]
    diff = (gx[..., None, :] - centers[None, None, None]) / s  # [N_h,vs,vs,N,2]
    basis = jnp.prod(cardinal_bspline(diff, n), axis=-1)      # [N_h, vs, vs, N]
    K = jnp.einsum("oin,hxyn->hoixy", weights, basis)         # [N_h,Cout,Cin,vs,vs]
    w_conv = jnp.transpose(K, (3, 4, 2, 0, 1)).reshape(vsize, vsize, Cin,
                                                       thetas.shape[0] * Cout)
    b_conv = jnp.tile(bias[None, :], (thetas.shape[0], 1)).reshape(1, -1)
    return w_conv, b_conv


# -----------------------------------------------------------------------------
# Pallas kernel: transposed im2col matmul  out^T(Ct, M) = w^T(Ct,K) @ x^T(K,M)
# -----------------------------------------------------------------------------
def _gconv_matmul_kernel(w_ref, x_ref, b_ref, o_ref):
    # w_ref: (Ctp, tile_k) bf16   -- transposed, K-padded sampled group kernel
    # x_ref: (tile_k, tile_m) bf16 -- transposed im2col tile (lane axis = M)
    # b_ref: (Ctp, 1) f32          -- bias (h-major fused channel)
    # o_ref: (Ctp, tile_m) f32     -- out^T block, resident across the K axis
    k = pl.program_id(1)
    acc = jnp.dot(w_ref[...], x_ref[...], preferred_element_type=jnp.float32)

    @pl.when(k == 0)
    def _init():
        o_ref[...] = acc + b_ref[...]            # bias broadcast along lanes

    @pl.when(k > 0)
    def _accum():
        o_ref[...] += acc


def _round_up(x, m):
    return (x + m - 1) // m * m


def gconv_rd_g(x_nchw, w_conv, b_conv, vsize, padding, b_padding, N_h, Cout,
               *, tile_m=2048, tile_k=512):
    B, Cin, H, W = x_nchw.shape
    Ct = w_conv.shape[-1]
    # TODO(synk): gconv_Rd_G source not provided; b_padding implemented as
    # padding by the B-spline kernel radius (same-size output); stride/dilation
    # fixed at their defaults (1). Matches the module when max_scaling == 1
    # (vsize == kernel_size); for scaled H-grids semantics may diverge.
    pad = padding + (vsize // 2 if b_padding else 0)

    # ---- bf16 cast BEFORE any relayout: every subsequent HBM pass (transpose,
    # pad, im2col slices/concat) moves half the bytes.
    x_bf = x_nchw.astype(jnp.bfloat16)
    x_t = jnp.transpose(x_bf, (1, 0, 2, 3))                   # (Cin, B, H, W)
    x_tp = jnp.pad(x_t, ((0, 0), (0, 0), (pad, pad), (pad, pad)))
    Hp, Wp = H + 2 * pad, W + 2 * pad
    Ho, Wo = Hp - vsize + 1, Wp - vsize + 1
    M = B * Ho * Wo                   # batch folded into the matmul lane axis

    K = vsize * vsize * Cin
    tile_k = min(tile_k, _round_up(K, 128))
    Kp = _round_up(K, tile_k)
    Ctp = _round_up(Ct, 8)            # sublane granularity for the output rows
    # Big tiles (~85% of HBM roofline) but keep >= 2 M-tiles so both of v7x's
    # TensorCores get work under the "parallel" axis.
    tile_m = max(128, min(tile_m, _round_up(pl.cdiv(M, 2), 128)))
    Mp = _round_up(M, tile_m)
    # VMEM @ defaults (tile_m=2048, tile_k=512, double-buffered):
    #   x 2*2 MiB + out 2*128 KiB + w ~tiny  ≈ 4.3 MiB  — fits v5e's 16 MiB
    #   default scoped limit and v7x's 32 MiB with lots of headroom.

    # ---- transposed im2col: build x^T (K, M) directly. K ordering
    # (kh, kw, cin) matches w_conv.reshape(K, Ct); the K zero-padding is folded
    # into the concat so the big operand is written exactly once.
    patches = [x_tp[:, :, kh:kh + Ho, kw:kw + Wo].reshape(Cin, M)
               for kh in range(vsize) for kw in range(vsize)]
    if Kp > K:
        patches.append(jnp.zeros((Kp - K, M), jnp.bfloat16))
    x_colT = jnp.concatenate(patches, axis=0)                 # (Kp, M) bf16
    if Mp > M:
        x_colT = jnp.pad(x_colT, ((0, 0), (0, Mp - M)))

    w_colT = jnp.pad(w_conv.reshape(K, Ct).T,
                     ((0, Ctp - Ct), (0, Kp - K))).astype(jnp.bfloat16)
    b_colT = jnp.pad(b_conv.reshape(Ct, 1),
                     ((0, Ctp - Ct), (0, 0))).astype(jnp.float32)

    grid_m, grid_k = Mp // tile_m, Kp // tile_k
    cost = pl.CostEstimate(
        flops=2 * Mp * Kp * Ctp,
        transcendentals=0,
        bytes_accessed=int(Kp * Mp * 2 + grid_m * Ctp * Kp * 2
                           + Ctp * Mp * 4 + Ctp * 4),
    )

    out_T = pl.pallas_call(
        _gconv_matmul_kernel,
        out_shape=jax.ShapeDtypeStruct((Ctp, Mp), jnp.float32),
        grid_spec=pltpu.PrefetchScalarGridSpec(
            num_scalar_prefetch=0,
            grid=(grid_m, grid_k),
            in_specs=[
                pl.BlockSpec((Ctp, tile_k), lambda m, k: (0, k)),     # w^T
                pl.BlockSpec((tile_k, tile_m), lambda m, k: (k, m)),  # x^T
                pl.BlockSpec((Ctp, 1), lambda m, k: (0, 0)),          # bias
            ],
            out_specs=pl.BlockSpec((Ctp, tile_m), lambda m, k: (0, m)),
        ),
        compiler_params=pltpu.CompilerParams(
            dimension_semantics=("parallel", "arbitrary")),
        cost_estimate=cost,
    )(w_colT, x_colT, b_colT)

    # out^T: row = h*Cout + cout, column = b*Ho*Wo + ho*Wo + wo.
    # Slice off sublane/lane padding (padded M columns hold bias garbage —
    # must stay sliced), then permute only the small leading axes: the Ho*Wo
    # block stays minor, so this is a contiguous-chunk shuffle.
    out = out_T[:Ct, :M].reshape(N_h, Cout, B, Ho, Wo)
    return jnp.transpose(out, (2, 1, 0, 3, 4))                # (B,Cout,N_h,H',W')


# -----------------------------------------------------------------------------
if __name__ == "__main__":
    key = jax.random.PRNGKey(0)
    k_w, k_b, k_x = jax.random.split(key, 3)

    # Small shapes consistent with the module
    B, Cin, Cout = 2, 4, 4
    H = W = 16
    kernel_size = 5
    N_h = 4                       # h_grid: 4 rotations in SO(2)
    b_order, b_scale = 2, 1.0
    d = 2

    # ---- deterministic parameter init (mirrors GConvRdG.__init__) ----
    centers, N, x_min, x_max = x_centers_init(d, kernel_size)
    stdv = math.sqrt(2.0) / math.sqrt(Cin * kernel_size ** d)
    weights = jax.random.uniform(k_w, (Cout, Cin, N), jnp.float32, -stdv, stdv)
    bias = jax.random.normal(k_b, (Cout,), jnp.float32)

    # virtual_kernel_size = round(max_scaling * max|center|) * 2 + 1 ; SO(2) scaling = 1
    max_center = float(jnp.max(jnp.abs(centers)))
    vsize = int(round(1.0 * max_center)) * 2 + 1

    thetas = 2.0 * jnp.pi * jnp.arange(N_h, dtype=jnp.float32) / N_h
    w_conv, b_conv = build_group_kernel(weights, bias, centers, vsize, thetas,
                                        b_order, b_scale)

    # ---- example input (PyTorch NCHW convention) ----
    x = jax.random.normal(k_x, (B, Cin, H, W), jnp.float32)

    out = gconv_rd_g(x, w_conv, b_conv, vsize, padding=0, b_padding=True,
                     N_h=N_h, Cout=Cout)
    out = jax.block_until_ready(out)

    # ---- reference check against lax conv with the same bf16 operand precision
    #      (f32 accumulation), using the same sampled kernel ----
    pad = vsize // 2
    x_nhwc = jnp.transpose(x, (0, 2, 3, 1))
    ref = lax.conv_general_dilated(
        x_nhwc.astype(jnp.bfloat16), w_conv.astype(jnp.bfloat16), (1, 1),
        [(pad, pad), (pad, pad)],
        dimension_numbers=("NHWC", "HWIO", "NHWC"),
        preferred_element_type=jnp.float32) + b_conv.reshape(1, 1, 1, -1)
    ref = jnp.transpose(ref.reshape(B, H, W, N_h, Cout), (0, 4, 3, 1, 2))

    assert out.shape == (B, Cout, N_h, H, W), out.shape
    err = float(jnp.max(jnp.abs(out - ref)))
    assert jnp.allclose(out, ref, atol=2e-3, rtol=2e-3), err
    print("KERNEL_OK")
</pallas_src>

<mosaic_0001>
module attributes {stable_mosaic.version = 11 : i64} {
  func.func @_gconv_matmul_kernel(%arg0: i32, %arg1: i32, %arg2: memref<16x128xbf16, #tpu.memory_space<vmem>>, %arg3: memref<128x256xbf16, #tpu.memory_space<vmem>>, %arg4: memref<16x1xf32, #tpu.memory_space<vmem>>, %arg5: memref<16x256xf32, #tpu.memory_space<vmem>>) attributes {dimension_semantics = [#tpu.dimension_semantics<parallel>, #tpu.dimension_semantics<arbitrary>], iteration_bounds = array<i64: 2, 1>, scalar_prefetch = 0 : i64, scratch_operands = 0 : i64, tpu.core_type = #tpu.core_type<tc>, window_params = [{transform_indices = @transform_0, window_bounds = array<i64: 16, 128>}, {transform_indices = @transform_1, window_bounds = array<i64: 128, 256>}, {pipeline_mode = #tpu.pipeline_mode<synchronous>, transform_indices = @transform_2, window_bounds = array<i64: 16, 1>}, {transform_indices = @transform_3, window_bounds = array<i64: 16, 256>}]} {
    %c0 = arith.constant 0 : index
    %c0_0 = arith.constant 0 : index
    %0 = vector.load %arg2[%c0, %c0_0] : memref<16x128xbf16, #tpu.memory_space<vmem>>, vector<16x128xbf16>
    %c0_1 = arith.constant 0 : index
    %c0_2 = arith.constant 0 : index
    %1 = vector.load %arg3[%c0_1, %c0_2] : memref<128x256xbf16, #tpu.memory_space<vmem>>, vector<128x256xbf16>
    %cst = arith.constant dense<0.000000e+00> : vector<16x256xf32>
    %2 = tpu.matmul %0, %1, %cst {dimension_numbers = #tpu.dot_dimension_numbers<[1], [0], [0], [1], [0, 0, 1, 1], [], []>} : vector<16x128xbf16>, vector<128x256xbf16>, vector<16x256xf32> -> vector<16x256xf32>
    %c0_i32 = arith.constant 0 : i32
    %3 = arith.cmpi eq, %arg1, %c0_i32 : i32
    %4 = arith.extui %3 : i1 to i32
    %c0_i32_3 = arith.constant 0 : i32
    %5 = arith.cmpi ne, %4, %c0_i32_3 : i32
    scf.if %5 {
      %c0_6 = arith.constant 0 : index
      %c0_7 = arith.constant 0 : index
      %9 = vector.load %arg4[%c0_6, %c0_7] : memref<16x1xf32, #tpu.memory_space<vmem>>, vector<16x1xf32>
      %10 = vector.broadcast %9 : vector<16x1xf32> to vector<16x256xf32>
      %11 = arith.addf %2, %10 : vector<16x256xf32>
      %c0_8 = arith.constant 0 : index
      %c0_9 = arith.constant 0 : index
      %12 = vector.load %arg5[%c0_8, %c0_9] : memref<16x256xf32, #tpu.memory_space<vmem>>, vector<16x256xf32>
      tpu.vector_store %arg5[%c0_8, %c0_9], %11 {strides = array<i32>} : memref<16x256xf32, #tpu.memory_space<vmem>>, vector<16x256xf32>,
    } else {
    }
    %c0_i32_4 = arith.constant 0 : i32
    %6 = arith.cmpi sgt, %arg1, %c0_i32_4 : i32
    %7 = arith.extui %6 : i1 to i32
    %c0_i32_5 = arith.constant 0 : i32
    %8 = arith.cmpi ne, %7, %c0_i32_5 : i32
    scf.if %8 {
      %c0_6 = arith.constant 0 : index
      %c0_7 = arith.constant 0 : index
      %9 = vector.load %arg5[%c0_6, %c0_7] : memref<16x256xf32, #tpu.memory_space<vmem>>, vector<16x256xf32>
      %10 = arith.addf %9, %2 : vector<16x256xf32>
      %c0_8 = arith.constant 0 : index
      %c0_9 = arith.constant 0 : index
      %11 = vector.load %arg5[%c0_8, %c0_9] : memref<16x256xf32, #tpu.memory_space<vmem>>, vector<16x256xf32>
      tpu.vector_store %arg5[%c0_8, %c0_9], %10 {strides = array<i32>} : memref<16x256xf32, #tpu.memory_space<vmem>>, vector<16x256xf32>,
    } else {
    }
    return
  }
  func.func @transform_0(%arg0: i32, %arg1: i32) -> (i32, i32) {
    %c0_i32 = arith.constant 0 : i32
    %c0_i32_0 = arith.constant 0 : i32
    return %c0_i32, %arg1 : i32, i32
  }
  func.func @transform_1(%arg0: i32, %arg1: i32) -> (i32, i32) {
    %c0_i32 = arith.constant 0 : i32
    return %arg1, %arg0 : i32, i32
  }
  func.func @transform_2(%arg0: i32, %arg1: i32) -> (i32, i32) {
    %c0_i32 = arith.constant 0 : i32
    %c0_i32_0 = arith.constant 0 : i32
    %c0_i32_1 = arith.constant 0 : i32
    return %c0_i32, %c0_i32_0 : i32, i32
  }
  func.func @transform_3(%arg0: i32, %arg1: i32) -> (i32, i32) {
    %c0_i32 = arith.constant 0 : i32
    %c0_i32_0 = arith.constant 0 : i32
    return %c0_i32, %arg0 : i32, i32
  }
}

</mosaic_0001>

<llo_original>
// kernel: tpu_custom_call.1
$region0: #{tpu_custom_call.1}
  #allocation0 [shape = 'u32[]', space=smem, size = 0x4, offset = 0x4, fixed_abs, tag = 'smem constant byte address 0x4 - core index']
  #allocation1 [shape = 'u32[144,128]{1,0:T(1,128)}', space=vmem, size = 0x12000, scoped, tag = 'internal scratch']
  %s0 = inlined_call_operand.vmem [shape: bf16[16,128], index: 0, kind: input, shape index: {}]
  %s1 = inlined_call_operand.hbm [shape: bf16[128,512], index: 1, kind: input, shape index: {}]
  %s2 = inlined_call_operand.vmem [shape: f32[16,1], index: 2, kind: input, shape index: {}]
  %s3 = inlined_call_operand.hbm [shape: f32[16,512], index: 3, kind: output, shape index: {}]
  %s4 = sld [smem:[#allocation0]]
  $region57: #{tpu_custom_call.1} parent=0
    _
  %s6 = ssub.s32 1, %s4
  %s7 = scalar_select 0, %s6, %s4
  $region1: #{tpu_custom_call.1} parent=0
    #allocation2 [shape = 'u8[131072]{0}', space=vmem, size = 0x20000, scoped, tag = 'input window, operand 1']
    #allocation3 [shape = 's32[2]{0}', space=sflag, size = 0x8, scoped, tag = 'scoped memory for tpu_custom_call.1']
    #allocation4 [shape = 's32[2]{0}', space=sflag, size = 0x8, scoped, tag = 'scoped memory for tpu_custom_call.1']
    #allocation5 [shape = 'u8[32768]{0}', space=vmem, size = 0x8000, scoped, tag = 'output window, operand 0']
    %8 = vsyncpa [#allocation3], 0
    %s9 = scalar_lea.sflag [#allocation3], 1
    %10 = vsyncpa %s9, 0
    %11 = vsyncpa [#allocation4], 0
    %s12 = scalar_lea.sflag [#allocation4], 1
    %13 = vsyncpa %s12, 0
    loop: start=0, step=1, limit=4
    $region2: #{tpu_custom_call.1} parent=1 // loop_pre_header
      _
    $region3: #{tpu_custom_call.1} parent=1 // loop_header
      %s15 = sphi 0, %s19
      %p16 = scmp.ge.s32.totalorder %s15, 4
      %s22 = sphi 0, %s34
      %s23 = sphi 0, %s30
      %s24 = sphi 0, %s22
      %s25 = sphi 0, %s23
      %s26 = sphi 0, %s24
      %s27 = sphi 0, %s25
      %s37 = sphi 0, %s39
      %s40 = sphi 0, %s37
      %s41 = sphi 0, %s40
      %s57 = sphi 0, %s41
      %s65 = sphi 0, %s67
      %s68 = sphi 0, %s65
      %s69 = sphi 0, %s68
      %s85 = sphi 0, %s69
      %s89 = sphi 0, %s89
      %s91 = sphi 0, %s89
      %s92 = sphi 0, %s91
      %s106 = sphi 0, %s92
      %s112 = sphi 0, %s114
      %s115 = sphi 0, %s112
      %s116 = sphi 0, %s115
      %s132 = sphi 0, %s116
    $region4: #{tpu_custom_call.1} parent=1 // loop_header_branch
      %18 = sbr.rel (%p16) target = $region8
    $region5: #{tpu_custom_call.1} parent=1 // loop_body
      %s20 = ssub.s32 %s15, 1
      %s21 = ssub.s32 %s15, 2
      %s28 = sadd.s32 1, %s23
      %p29 = scmp.ge.s32.totalorder %s28, 1
      %s30 = scalar_select %p29, 0, %s28
      %s31 = sadd.s32 1, %s22
      %s32 = scalar_select %p29, %s31, %s22
      %p33 = scmp.ge.s32.totalorder %s32, 2
      %s34 = scalar_select %p33, 0, %s32
      %s35 = ssub.s32 %s23, %s30
      %p36 = scmp.eq.s32.totalorder %s35, 0
      %s38 = sadd.s32 %s37, 1
      %s39 = scalar_select %p36, %s37, %s38
      %p42 = pneg %p36
      %p43 = scmp.eq.s32.totalorder %s15, 1
      %p44 = por %p42, %p43
      %p45 = scmp.ne.s32.totalorder %s37, %s40
      %p46 = scmp.eq.s32.totalorder %s15, 0
      %p47 = por %p45, %p46
      %p48 = scmp.ne.s32.totalorder %s37, %s40
      %p49 = scmp.eq.s32.totalorder %s20, 1
      %p50 = por %p48, %p49
      %p51 = scmp.ne.s32.totalorder %s40, %s41
      %p52 = scmp.eq.s32.totalorder %s20, 0
      %p53 = por %p51, %p52
      %p54 = scmp.ne.s32.totalorder %s40, %s41
      %p55 = scmp.eq.s32.totalorder %s21, 1
      %p56 = por %p54, %p55
      %p58 = scmp.ne.s32.totalorder %s41, %s57
      %p59 = scmp.eq.s32.totalorder %s21, 0
      %p60 = por %p58, %p59
      %s61 = ssub.s32 %s23, %s30
      %s62 = ssub.s32 %s22, %s34
      %s63 = sor.u32 %s61, %s62
      %p64 = scmp.eq.s32.totalorder %s63, 0
      %s66 = sadd.s32 %s65, 1
      %s67 = scalar_select %p64, %s65, %s66
      %p70 = pneg %p64
      %p71 = scmp.eq.s32.totalorder %s15, 1
      %p72 = por %p70, %p71
      %p73 = scmp.ne.s32.totalorder %s65, %s68
      %p74 = scmp.eq.s32.totalorder %s15, 0
      %p75 = por %p73, %p74
      %p76 = scmp.ne.s32.totalorder %s65, %s68
      %p77 = scmp.eq.s32.totalorder %s20, 1
      %p78 = por %p76, %p77
      %p79 = scmp.ne.s32.totalorder %s68, %s69
      %p80 = scmp.eq.s32.totalorder %s20, 0
      %p81 = por %p79, %p80
      %p82 = scmp.ne.s32.totalorder %s68, %s69
      %p83 = scmp.eq.s32.totalorder %s21, 1
      %p84 = por %p82, %p83
      %p86 = scmp.ne.s32.totalorder %s69, %s85
      %p87 = scmp.eq.s32.totalorder %s21, 0
      %p88 = por %p86, %p87
      %s90 = sadd.s32 %s89, 1
      %p93 = scmp.eq.s32.totalorder %s15, 1
      %p94 = scmp.ne.s32.totalorder %s89, %s91
      %p95 = scmp.eq.s32.totalorder %s15, 0
      %p96 = por %p94, %p95
      %p97 = scmp.ne.s32.totalorder %s89, %s91
      %p98 = scmp.eq.s32.totalorder %s20, 1
      %p99 = por %p97, %p98
      %p100 = scmp.ne.s32.totalorder %s91, %s92
      %p101 = scmp.eq.s32.totalorder %s20, 0
      %p102 = por %p100, %p101
      %p103 = scmp.ne.s32.totalorder %s91, %s92
      %p104 = scmp.eq.s32.totalorder %s21, 1
      %p105 = por %p103, %p104
      %p107 = scmp.ne.s32.totalorder %s92, %s106
      %p108 = scmp.eq.s32.totalorder %s21, 0
      %p109 = por %p107, %p108
      %s110 = ssub.s32 %s22, %s34
      %p111 = scmp.eq.s32.totalorder %s110, 0
      %s113 = sadd.s32 %s112, 1
      %s114 = scalar_select %p111, %s112, %s113
      %p117 = pneg %p111
      %p118 = scmp.eq.s32.totalorder %s15, 1
      %p119 = por %p117, %p118
      %p120 = scmp.ne.s32.totalorder %s112, %s115
      %p121 = scmp.eq.s32.totalorder %s15, 0
      %p122 = por %p120, %p121
      %p123 = scmp.ne.s32.totalorder %s112, %s115
      %p124 = scmp.eq.s32.totalorder %s20, 1
      %p125 = por %p123, %p124
      %p126 = scmp.ne.s32.totalorder %s115, %s116
      %p127 = scmp.eq.s32.totalorder %s20, 0
      %p128 = por %p126, %p127
      %p129 = scmp.ne.s32.totalorder %s115, %s116
      %p130 = scmp.eq.s32.totalorder %s21, 1
      %p131 = por %p129, %p130
      %p133 = scmp.ne.s32.totalorder %s116, %s132
      %p134 = scmp.eq.s32.totalorder %s21, 0
      %p135 = por %p133, %p134
      %p136 = scmp.le.s32.totalorder 1, %s15
      %p137 = scmp.lt.s32.totalorder %s15, 3
      %p138 = pnand %p136, %p137
      %p139 = pneg %p138
      // Predicated region
      $region9: #{tpu_custom_call.1} parent=5 // pred_check
        _
      $region10: #{tpu_custom_call.1} parent=5 // pred_check_branch
        %141 = sbr.rel (%p138) target = $region12
      $region11: #{tpu_custom_call.1} parent=5 // pred_region
        %s142 = ssub.s32 %s15, 1
        // Predicated region
        $region13: #{tpu_custom_call.1} parent=11 // pred_check
          %p143 = pneg %p53
        $region14: #{tpu_custom_call.1} parent=11 // pred_check_branch
          %145 = sbr.rel (%p143) target = $region16
        $region15: #{tpu_custom_call.1} parent=11 // pred_region
          %p146 = scmp.lt.s32.totalorder %s25, 0
          %s147 = scalar_select %p146, %s25, 0
          %s148 = smul.addr %s147, 4
          %s149 = scalar_lea.vmem %s0, %s148
        $region16: #{tpu_custom_call.1} parent=11 // pred_fallthru
          _
        // Predicated region
        $region17: #{tpu_custom_call.1} parent=11 // pred_check
          %p150 = pneg %p102
        $region18: #{tpu_custom_call.1} parent=11 // pred_check_branch
          %152 = sbr.rel (%p150) target = $region20
        $region19: #{tpu_custom_call.1} parent=11 // pred_region
          _
        $region20: #{tpu_custom_call.1} parent=11 // pred_fallthru
          _
      $region12: #{tpu_custom_call.1} parent=5 // pred_fallthru
        _
      %p153 = scmp.lt.s32.totalorder %s15, 2
      // Predicated region
      $region21: #{tpu_custom_call.1} parent=5 // pred_check
        %p154 = pneg %p153
      $region22: #{tpu_custom_call.1} parent=5 // pred_check_branch
        %156 = sbr.rel (%p154) target = $region24
      $region23: #{tpu_custom_call.1} parent=5 // pred_region
        // Predicated region
        $region25: #{tpu_custom_call.1} parent=23 // pred_check
          %p157 = pneg %p75
        $region26: #{tpu_custom_call.1} parent=23 // pred_check_branch
          %159 = sbr.rel (%p157) target = $region28
        $region27: #{tpu_custom_call.1} parent=23 // pred_region
          %s160 = sand.u32 %s65, 1
          %s161 = scalar_lea.sflag [#allocation3], %s160
          %s162 = sand.u32 %s65, 1
          %s163 = smul.addr %s162, 128
          %s164 = scalar_lea.vmem [#allocation2], %s163
          %s165 = smul.u32 16, %s23
          %s166 = smul.u32 2, %s22
          %s168 = ssub.s32 2048, 2048
          %169 = vsyncadd %s161, %s168
          %s170 = smul.addr %s165, 4
          %s171 = sadd.s32 %s166, %s170
          %s172 = smul.addr %s171, 64
          %s173 = scalar_lea.hbm %s1, %s172
          %s174 = sshll.u32 %s164, 4
          %s175 = int_to_ptr.vmem [resolvable:$true] %s174
          %180 = dma.hbm_to_vmem [thread:$0]  %s173, 2048, %s175, %s161, 256, 128, 8
        $region28: #{tpu_custom_call.1} parent=23 // pred_fallthru
          _
      $region24: #{tpu_custom_call.1} parent=5 // pred_fallthru
        _
      %p181 = scmp.le.s32.totalorder 1, %s15
      %p182 = scmp.lt.s32.totalorder %s15, 3
      %p183 = pnand %p181, %p182
      %p184 = pneg %p183
      // Predicated region
      $region29: #{tpu_custom_call.1} parent=5 // pred_check
        _
      $region30: #{tpu_custom_call.1} parent=5 // pred_check_branch
        %186 = sbr.rel (%p183) target = $region32
      $region31: #{tpu_custom_call.1} parent=5 // pred_region
        %s187 = ssub.s32 %s15, 1
        %s188 = sand.u32 %s68, 1
        %s189 = scalar_lea.sflag [#allocation3], %s188
        %s190 = sand.u32 %s68, 1
        %s191 = smul.addr %s190, 128
        %s192 = scalar_lea.vmem [#allocation2], %s191
        // Predicated region
        $region33: #{tpu_custom_call.1} parent=31 // pred_check
          %p193 = pneg %p81
        $region34: #{tpu_custom_call.1} parent=31 // pred_check_branch
          %195 = sbr.rel (%p193) target = $region36
        $region35: #{tpu_custom_call.1} parent=31 // pred_region
          %196 = dma.done %s189, 2048
        $region36: #{tpu_custom_call.1} parent=31 // pred_fallthru
          _
        %p197 = scmp.lt.s32.totalorder %s25, 0
        %s198 = scalar_select %p197, %s25, 0
        %s199 = smul.addr %s198, 4
        %s200 = scalar_lea.vmem %s0, %s199
        %p201 = pneg %p53
        %p202 = pneg %p50
        %s203 = sand.u32 %s68, 1
        %s204 = scalar_lea.sflag [#allocation3], %s203
        %s205 = sand.u32 %s68, 1
        %s206 = smul.addr %s205, 128
        %s207 = scalar_lea.vmem [#allocation2], %s206
        %p208 = pneg %p81
        %p209 = pneg %p78
        %p210 = pneg %p102
        %p211 = pneg %p99
        %p212 = pneg %p128
        %p213 = pneg %p125
        %s214 = sand.u32 %s115, 1
        %s215 = scalar_lea.sflag [#allocation4], %s214
        %s216 = sand.u32 %s115, 1
        %s217 = smul.addr %s216, 32
        %s218 = scalar_lea.vmem [#allocation5], %s217
        %p219 = scmp.lt.s32.totalorder %s25, 0
        %s220 = scalar_select %p219, %s25, 0
        %s221 = smul.addr %s220, 4
        %s222 = scalar_lea.vmem %s0, %s221
        %s223 = smul.u32 16, %s25
        %s224 = smul.u32 2, %s24
        %s225 = smul.u32 2, %s24
        %v227 = vld [vmem:[%s222] sm:$0xf]
        %v228 = vld [vmem:[%s222 + $0x4] sm:$0xf]
        %v229 = vld [vmem:[%s192] sm:$0xff]
        %v230 = vld [vmem:[%s192 + $0x8] sm:$0xff]
        %v231 = vld [vmem:[%s192 + $0x10] sm:$0xff]
        %v232 = vld [vmem:[%s192 + $0x18] sm:$0xff]
        %v233 = vld [vmem:[%s192 + $0x20] sm:$0xff]
        %v234 = vld [vmem:[%s192 + $0x28] sm:$0xff]
        %v235 = vld [vmem:[%s192 + $0x30] sm:$0xff]
        %v236 = vld [vmem:[%s192 + $0x38] sm:$0xff]
        %v237 = vld [vmem:[%s192 + $0x40] sm:$0xff]
        %v238 = vld [vmem:[%s192 + $0x48] sm:$0xff]
        %v239 = vld [vmem:[%s192 + $0x50] sm:$0xff]
        %v240 = vld [vmem:[%s192 + $0x58] sm:$0xff]
        %v241 = vld [vmem:[%s192 + $0x60] sm:$0xff]
        %v242 = vld [vmem:[%s192 + $0x68] sm:$0xff]
        %v243 = vld [vmem:[%s192 + $0x70] sm:$0xff]
        %v244 = vld [vmem:[%s192 + $0x78] sm:$0xff]
        %v247 = vunpack.c.l.b16 %v227
        %v248 = vunpack.c.l.b16 %v228
        %v249 = vpack.c.b16 %v248, %v247
        %v267 = vunpack.c.l.b16 %v229
        %v268 = vunpack.c.h.b16 %v229
        %v269 = vunpack.c.l.b16 %v230
        %v270 = vunpack.c.h.b16 %v230
        %v271 = vunpack.c.l.b16 %v231
        %v272 = vunpack.c.h.b16 %v231
        %v273 = vunpack.c.l.b16 %v232
        %v274 = vunpack.c.h.b16 %v232
        %v275 = vunpack.c.l.b16 %v233
        %v276 = vunpack.c.h.b16 %v233
        %v277 = vunpack.c.l.b16 %v234
        %v278 = vunpack.c.h.b16 %v234
        %v279 = vunpack.c.l.b16 %v235
        %v280 = vunpack.c.h.b16 %v235
        %v281 = vunpack.c.l.b16 %v236
        %v282 = vunpack.c.h.b16 %v236
        %v283 = vunpack.c.l.b16 %v237
        %v284 = vunpack.c.h.b16 %v237
        %v285 = vunpack.c.l.b16 %v238
        %v286 = vunpack.c.h.b16 %v238
        %v287 = vunpack.c.l.b16 %v239
        %v288 = vunpack.c.h.b16 %v239
        %v289 = vunpack.c.l.b16 %v240
        %v290 = vunpack.c.h.b16 %v240
        %v291 = vunpack.c.l.b16 %v241
        %v292 = vunpack.c.h.b16 %v241
        %v293 = vunpack.c.l.b16 %v242
        %v294 = vunpack.c.h.b16 %v242
        %v295 = vunpack.c.l.b16 %v243
        %v296 = vunpack.c.h.b16 %v243
        %v297 = vunpack.c.l.b16 %v244
        %v298 = vunpack.c.h.b16 %v244
        %v299 = vpack.c.b16 %v269, %v267
        %v300 = vpack.c.b16 %v270, %v268
        %v301 = vpack.c.b16 %v273, %v271
        %v302 = vpack.c.b16 %v274, %v272
        %v303 = vpack.c.b16 %v277, %v275
        %v304 = vpack.c.b16 %v278, %v276
        %v305 = vpack.c.b16 %v281, %v279
        %v306 = vpack.c.b16 %v282, %v280
        %v307 = vpack.c.b16 %v285, %v283
        %v308 = vpack.c.b16 %v286, %v284
        %v309 = vpack.c.b16 %v289, %v287
        %v310 = vpack.c.b16 %v290, %v288
        %v311 = vpack.c.b16 %v293, %v291
        %v312 = vpack.c.b16 %v294, %v292
        %v313 = vpack.c.b16 %v297, %v295
        %v314 = vpack.c.b16 %v298, %v296
        %331 = vmatprep.subr.bf16.mxu0 %v300
        %332 = vmatpush1.bf16.msra.mxu0 %v299
        %333 = vmatprep.subr.bf16.mxu0 %v302
        %334 = vmatpush1.bf16.msra.mxu0 %v301
        %335 = vmatprep.subr.bf16.mxu0 %v304
        %336 = vmatpush1.bf16.msra.mxu0 %v303
        %337 = vmatprep.subr.bf16.mxu0 %v306
        %338 = vmatpush1.bf16.msra.mxu0 %v305
        %339 = vmatprep.subr.bf16.mxu0 %v308
        %340 = vmatpush1.bf16.msra.mxu0 %v307
        %341 = vmatprep.subr.bf16.mxu0 %v310
        %342 = vmatpush1.bf16.msra.mxu0 %v309
        %343 = vmatprep.subr.bf16.mxu0 %v312
        %344 = vmatpush1.bf16.msra.mxu0 %v311
        %345 = vmatprep.subr.bf16.mxu0 %v314
        %346 = vmatpush1.bf16.msra.mxu0 %v313
        %347 = vmatprep.subr.bf16.mxu0 0
        %348 = vmatpush1.bf16.msra.mxu0 0
        %349 = vmatprep.subr.bf16.mxu0 0
        %350 = vmatpush1.bf16.msra.mxu0 0
        %351 = vmatprep.subr.bf16.mxu0 0
        %352 = vmatpush1.bf16.msra.mxu0 0
        %353 = vmatprep.subr.bf16.mxu0 0
        %354 = vmatpush1.bf16.msra.mxu0 0
        %355 = vmatprep.subr.bf16.mxu0 0
        %356 = vmatpush1.bf16.msra.mxu0 0
        %357 = vmatprep.subr.bf16.mxu0 0
        %358 = vmatpush1.bf16.msra.mxu0 0
        %359 = vmatprep.subr.bf16.mxu0 0
        %360 = vmatpush1.bf16.msra.mxu0 0
        %361 = vmatprep.subr.bf16.mxu0 0
        %362 = vmatpush1.bf16.msra.mxu0 0
        %363 = vmatprep.mubr.bf16.mxu0 0
        %364 = vmatmul.mubr.bf16.gmra.mrb[0].mxu0 %v249
        %v365 = vpop.f32.mrb[0].mxu0
        %v366 = vadd.f32 0.0, %v365
        %v367 = vpop.f32.mrb[0].mxu0
        %v368 = vadd.f32 0.0, %v367
        %v369 = vpop.f32.mrb[0].mxu0
        %v370 = vadd.f32 0.0, %v369
        %v371 = vpop.f32.mrb[0].mxu0
        %v372 = vadd.f32 0.0, %v371
        %373 = vdwg.mxu0
        %p374 = scmp.eq.s32.totalorder %s25, 0
        // Predicated region
        $region37: #{tpu_custom_call.1} parent=31 // pred_check
          %p375 = pneg %p374
        $region38: #{tpu_custom_call.1} parent=31 // pred_check_branch
          %377 = sbr.rel (%p375) target = $region40
        $region39: #{tpu_custom_call.1} parent=31 // pred_region
          %v378 = vld [vmem:[%s2] sm:$0xff]
          %v379 = vld [vmem:[%s2 + $0x8] sm:$0xff]
          %381 = vset.pattern.permute.xlu0 0
          %382 = vperm.xlu0 %381, %v378
          %v383 = vpop.permute.xlu0 %382
          %386 = vset.pattern.permute.xlu0 0
          %387 = vperm.xlu0 %386, %v379
          %v388 = vpop.permute.xlu0 %387
          %v390 = vadd.f32 %v366, %v383
          %v391 = vadd.f32 %v368, %v383
          %v392 = vadd.f32 %v370, %v388
          %v393 = vadd.f32 %v372, %v388
          %394 = vst [vmem:[%s218] sm:$0xff] %v390
          %395 = vst [vmem:[%s218 + $0x8] sm:$0xff] %v391
          %396 = vst [vmem:[%s218 + $0x10] sm:$0xff] %v392
          %397 = vst [vmem:[%s218 + $0x18] sm:$0xff] %v393
        $region40: #{tpu_custom_call.1} parent=31 // pred_fallthru
          _
        %p398 = scmp.gt.s32.totalorder %s25, 0
        // Predicated region
        $region41: #{tpu_custom_call.1} parent=31 // pred_check
          %p399 = pneg %p398
        $region42: #{tpu_custom_call.1} parent=31 // pred_check_branch
          %401 = sbr.rel (%p399) target = $region44
        $region43: #{tpu_custom_call.1} parent=31 // pred_region
          %v402 = vld [vmem:[%s218] sm:$0xff]
          %v403 = vld [vmem:[%s218 + $0x8] sm:$0xff]
          %v404 = vld [vmem:[%s218 + $0x10] sm:$0xff]
          %v405 = vld [vmem:[%s218 + $0x18] sm:$0xff]
          %v406 = vadd.f32 %v402, %v366
          %v407 = vadd.f32 %v403, %v368
          %v408 = vadd.f32 %v404, %v370
          %v409 = vadd.f32 %v405, %v372
          %410 = vst [vmem:[%s218] sm:$0xff] %v406
          %411 = vst [vmem:[%s218 + $0x8] sm:$0xff] %v407
          %412 = vst [vmem:[%s218 + $0x10] sm:$0xff] %v408
          %413 = vst [vmem:[%s218 + $0x18] sm:$0xff] %v409
        $region44: #{tpu_custom_call.1} parent=31 // pred_fallthru
          _
        %s414 = sand.u32 %s115, 1
        %s415 = scalar_lea.sflag [#allocation4], %s414
        %s416 = sand.u32 %s115, 1
        %s417 = smul.addr %s416, 32
        %s418 = scalar_lea.vmem [#allocation5], %s417
        // Predicated region
        $region45: #{tpu_custom_call.1} parent=31 // pred_check
          %p419 = pneg %p125
        $region46: #{tpu_custom_call.1} parent=31 // pred_check_branch
          %421 = sbr.rel (%p419) target = $region48
        $region47: #{tpu_custom_call.1} parent=31 // pred_region
          %s422 = smul.u32 2, %s24
          %s424 = ssub.s32 512, 512
          %425 = vsyncadd %s415, %s424
          %s426 = smul.addr %s422, 128
          %s427 = scalar_lea.hbm %s3, %s426
          %s428 = sshll.u32 %s418, 4
          %s429 = int_to_ptr.vmem [resolvable:$true] %s428
          %434 = dma.vmem_to_hbm [thread:$0]  %s429, 512, %s427, %s415, 256, 512, 16
        $region48: #{tpu_custom_call.1} parent=31 // pred_fallthru
          _
      $region32: #{tpu_custom_call.1} parent=5 // pred_fallthru
        _
      %p435 = scmp.le.s32.totalorder 2, %s15
      // Predicated region
      $region49: #{tpu_custom_call.1} parent=5 // pred_check
        %p436 = pneg %p435
      $region50: #{tpu_custom_call.1} parent=5 // pred_check_branch
        %438 = sbr.rel (%p436) target = $region52
      $region51: #{tpu_custom_call.1} parent=5 // pred_region
        %s439 = ssub.s32 %s15, 2
        // Predicated region
        $region53: #{tpu_custom_call.1} parent=51 // pred_check
          %p440 = pneg %p131
        $region54: #{tpu_custom_call.1} parent=51 // pred_check_branch
          %442 = sbr.rel (%p440) target = $region56
        $region55: #{tpu_custom_call.1} parent=51 // pred_region
          %s443 = sand.u32 %s116, 1
          %s444 = scalar_lea.sflag [#allocation4], %s443
          %s445 = sand.u32 %s116, 1
          %s446 = smul.addr %s445, 32
          %s447 = scalar_lea.vmem [#allocation5], %s446
          %448 = dma.done %s444, 512
        $region56: #{tpu_custom_call.1} parent=51 // pred_fallthru
          _
      $region52: #{tpu_custom_call.1} parent=5 // pred_fallthru
        _
    $region6: #{tpu_custom_call.1} parent=1 // loop_footer
      %s19 = sadd.s32 1, %s15
    $region7: #{tpu_custom_call.1} parent=1 // loop_footer_branch
      %14 = sbr.rel target = $region3
    $region8: #{tpu_custom_call.1} parent=1 // loop_exit
      _
    %449 = vsyncpa [#allocation3], 1
    %s450 = scalar_lea.sflag [#allocation3], 1
    %451 = vsyncpa %s450, 1
    %452 = vsyncpa [#allocation4], 1
    %s453 = scalar_lea.sflag [#allocation4], 1
    %454 = vsyncpa %s453, 1

</llo_original>
